<compile_context>
chip_gen: v6e
topology: v6e:2x2x1
jax: 0.10.0
libtpu: 0.0.40
codegen_flags: <defaults>
</compile_context>

<pallas_src>
import functools

import jax
import jax.numpy as jnp
from jax import lax
from jax.experimental import pallas as pl
from jax.experimental.pallas import tpu as pltpu


# ----------------------------------------------------------------------------
# helpers
# ----------------------------------------------------------------------------
def _round_up(x, m):
    return ((x + m - 1) // m) * m


def _choose_tm(total_rows, target=256):
    """Largest power-of-two row tile <= target that is not absurdly bigger than
    the problem (keeps padding overhead small for tiny test shapes)."""
    tm = 8
    while tm * 2 <= target and tm * 2 <= max(8, total_rows):
        tm *= 2
    return tm


def _choose_tk(K, target=512):
    if K <= target:
        return K
    for cand in (512, 256, 128):
        if K % cand == 0:
            return cand
    return K  # no nice divisor -> keep full K


def _gemm_compiler_params(tm, tk, out_cols, n_w, itemsize):
    # rough VMEM need: double-buffered x / weight / output blocks + f32 acc.
    est = (2 * tm * tk * itemsize
           + 2 * tk * n_w * itemsize
           + 2 * tm * out_cols * itemsize
           + tm * n_w * 4)
    vmem = min(48 * 1024 * 1024, max(32 * 1024 * 1024, int(1.5 * est)))
    return pltpu.CompilerParams(
        dimension_semantics=("parallel", "arbitrary"),
        vmem_limit_bytes=vmem)


# ----------------------------------------------------------------------------
# Grouped GEMM kernels (scalar-prefetched tile->expert map + valid-row counts)
# ----------------------------------------------------------------------------
def _grouped_gemm_silu_kernel(te_ref, nrows_ref, x_ref, w_ref,
                              first_ref, inter_ref, acc_ref, *, inter):
    t = pl.program_id(0)
    kk = pl.program_id(1)

    @pl.when(kk == 0)
    def _():
        acc_ref[...] = jnp.zeros_like(acc_ref)

    # Fully padded slack tiles have zero valid rows: skip the MXU work.
    @pl.when(nrows_ref[t] > 0)
    def _():
        # x: (tm, tk), w: (tk, N) -> standard contraction, N lane-dense.
        acc_ref[...] += jnp.dot(x_ref[...], w_ref[0],
                                preferred_element_type=jnp.float32)

    @pl.when(kk == pl.num_programs(1) - 1)
    def _():
        acc = acc_ref[...]
        first_ref[...] = acc.astype(first_ref.dtype)
        gate = acc[:, :inter]
        up = acc[:, inter:]
        act = gate * (1.0 / (1.0 + jnp.exp(-gate)))   # SiLU in f32 (EUP exp)
        inter_ref[...] = (act * up).astype(inter_ref.dtype)


def _grouped_gemm_kernel(te_ref, nrows_ref, x_ref, w_ref, o_ref, acc_ref):
    t = pl.program_id(0)
    kk = pl.program_id(1)

    @pl.when(kk == 0)
    def _():
        acc_ref[...] = jnp.zeros_like(acc_ref)

    @pl.when(nrows_ref[t] > 0)
    def _():
        acc_ref[...] += jnp.dot(x_ref[...], w_ref[0],
                                preferred_element_type=jnp.float32)

    @pl.when(kk == pl.num_programs(1) - 1)
    def _():
        o_ref[...] = acc_ref[...].astype(o_ref.dtype)


def grouped_gemm_silu(x_padded, w_kn, tile_expert, tile_nrows, inter, tm, tk):
    """x_padded: [Mp, K] rows grouped by expert (tm-aligned groups, zero pad).
       w_kn:     [E, K, 2*inter] pre-transposed gate_up weights.
       tile_expert: [Mp//tm] int32, expert owning each row tile.
       tile_nrows:  [Mp//tm] int32, number of valid rows in each tile.
       Returns (first_gemm_padded [Mp, 2*inter], silu_mul_padded [Mp, inter])."""
    Mp, K = x_padded.shape
    E, Kw, N = w_kn.shape
    assert K == Kw and N == 2 * inter and Mp % tm == 0
    if K % tk != 0:
        tk = K
    num_tiles, num_k = Mp // tm, K // tk

    kernel = functools.partial(_grouped_gemm_silu_kernel, inter=inter)
    first, inter_out = pl.pallas_call(
        kernel,
        out_shape=(jax.ShapeDtypeStruct((Mp, N), x_padded.dtype),
                   jax.ShapeDtypeStruct((Mp, inter), x_padded.dtype)),
        grid_spec=pltpu.PrefetchScalarGridSpec(
            num_scalar_prefetch=2,
            grid=(num_tiles, num_k),
            in_specs=[
                pl.BlockSpec((tm, tk), lambda t, k, te, nr: (t, k)),
                pl.BlockSpec((1, tk, N), lambda t, k, te, nr: (te[t], k, 0)),
            ],
            out_specs=(
                pl.BlockSpec((tm, N), lambda t, k, te, nr: (t, 0)),
                pl.BlockSpec((tm, inter), lambda t, k, te, nr: (t, 0)),
            ),
            scratch_shapes=[pltpu.VMEM((tm, N), jnp.float32)],
        ),
        compiler_params=_gemm_compiler_params(
            tm, tk, N + inter, N, x_padded.dtype.itemsize),
    )(tile_expert, tile_nrows, x_padded, w_kn)
    return first, inter_out


def grouped_gemm(x_padded, w_kn, tile_expert, tile_nrows, tm, tk):
    """x_padded: [Mp, K]; w_kn: [E, K, N]; tile_expert/tile_nrows: [Mp//tm]."""
    Mp, K = x_padded.shape
    E, Kw, N = w_kn.shape
    assert K == Kw and Mp % tm == 0
    if K % tk != 0:
        tk = K
    num_tiles, num_k = Mp // tm, K // tk

    out = pl.pallas_call(
        _grouped_gemm_kernel,
        out_shape=jax.ShapeDtypeStruct((Mp, N), x_padded.dtype),
        grid_spec=pltpu.PrefetchScalarGridSpec(
            num_scalar_prefetch=2,
            grid=(num_tiles, num_k),
            in_specs=[
                pl.BlockSpec((tm, tk), lambda t, k, te, nr: (t, k)),
                pl.BlockSpec((1, tk, N), lambda t, k, te, nr: (te[t], k, 0)),
            ],
            out_specs=pl.BlockSpec((tm, N), lambda t, k, te, nr: (t, 0)),
            scratch_shapes=[pltpu.VMEM((tm, N), jnp.float32)],
        ),
        compiler_params=_gemm_compiler_params(
            tm, tk, N, N, x_padded.dtype.itemsize),
    )(tile_expert, tile_nrows, x_padded, w_kn)
    return out


# ----------------------------------------------------------------------------
# Full forward pass (mirrors Qwen3MoeGroupedGEMMBlock.forward)
# ----------------------------------------------------------------------------
def qwen3_moe_forward(hidden_states, gate, gate_up_proj, down_proj,
                      top_k, norm_topk_prob=True, compute_dtype=None):
    B, S, H = hidden_states.shape
    E = gate.shape[0]
    inter = down_proj.shape[-1]
    num_tokens = B * S
    total_tokens = num_tokens * top_k

    hs = hidden_states.reshape(-1, H)

    # --- router (glue; tiny (T,H)x(H,E) matmul + softmax/top-k) ---
    router_logits = hs @ gate.T                                   # (T, E)
    routing_weights = jax.nn.softmax(router_logits.astype(jnp.float32), axis=-1)
    routing_weights, selected_experts = lax.top_k(routing_weights, top_k)
    if norm_topk_prob:
        routing_weights = routing_weights / routing_weights.sum(-1, keepdims=True)
    routing_weights = routing_weights.astype(hs.dtype)

    # --- routing plan (glue, tiny int ops) ---
    flat_sel = selected_experts.reshape(-1).astype(jnp.int32)     # (T*k,)
    counts = jnp.bincount(flat_sel, length=E)                     # (E,)
    gather_indices = jnp.argsort(flat_sel, stable=True)           # (T*k,)
    inv_indices = (jnp.zeros((total_tokens,), jnp.int32)
                   .at[gather_indices]
                   .set(jnp.arange(total_tokens, dtype=jnp.int32)))

    # tile / padding geometry (all static shapes)
    tm = _choose_tm(total_tokens)
    # worst case each (non-empty) expert group wastes < tm rows of padding
    Mp = _round_up(total_tokens + min(E, total_tokens) * (tm - 1), tm)
    num_tiles = Mp // tm

    padded_counts = ((counts + tm - 1) // tm) * tm
    padded_ends = jnp.cumsum(padded_counts)
    padded_starts = padded_ends - padded_counts
    orig_ends = jnp.cumsum(counts)
    orig_starts = orig_ends - counts

    tile_starts = jnp.arange(num_tiles, dtype=jnp.int32) * tm
    tile_expert = jnp.minimum(
        jnp.searchsorted(padded_ends, tile_starts, side='right'),
        E - 1).astype(jnp.int32)
    tile_nrows = jnp.clip(
        counts[tile_expert] - (tile_starts - padded_starts[tile_expert]),
        0, tm).astype(jnp.int32)

    rows = jnp.arange(Mp, dtype=jnp.int32)
    row_expert = tile_expert[rows // tm]
    within = rows - padded_starts[row_expert]
    row_valid = within < counts[row_expert]
    src_sorted = orig_starts[row_expert] + jnp.clip(
        within, 0, jnp.maximum(counts[row_expert] - 1, 0))
    src_sorted = jnp.minimum(src_sorted, total_tokens - 1)

    # dest: padded-buffer row of each sorted (expert-ordered) row i
    perm_expert = flat_sel[gather_indices]
    dest = (padded_starts[perm_expert]
            + (jnp.arange(total_tokens, dtype=jnp.int32) - orig_starts[perm_expert]))

    # --- permute + pad via a single gather (no scatters of activations) ---
    src_token = gather_indices[src_sorted]
    if top_k > 1:
        src_token = src_token // top_k
    x_padded = jnp.where(row_valid[:, None], hs[src_token], 0).astype(hs.dtype)

    # --- weights: pre-transpose once to [E, K, N] (store like this in practice) ---
    w1 = jnp.swapaxes(gate_up_proj, 1, 2)   # [E, H, 2I]
    w2 = jnp.swapaxes(down_proj, 1, 2)      # [E, I, H]
    if compute_dtype is not None:           # e.g. bf16 on v6e/v7x for MXU rate
        x_padded = x_padded.astype(compute_dtype)
        w1 = w1.astype(compute_dtype)
        w2 = w2.astype(compute_dtype)

    # --- grouped GEMM 1 + fused SiLU-and-mul (Pallas) ---
    first_padded, inter_padded = grouped_gemm_silu(
        x_padded, w1, tile_expert, tile_nrows, inter, tm, _choose_tk(H))

    # --- grouped GEMM 2 (Pallas) ---
    second_padded = grouped_gemm(inter_padded, w2, tile_expert, tile_nrows,
                                 tm, _choose_tk(inter))

    # --- un-pad / un-permute with gathers only (glue) ---
    first_gemm = jnp.take(first_padded, dest, axis=0)             # (T*k, 2I)
    intermediate = jnp.take(inter_padded, dest, axis=0)           # (T*k, I)
    second_gemm = jnp.take(second_padded, dest, axis=0)           # (T*k, H)
    hidden_states_unpermute = jnp.take(second_gemm, inv_indices, axis=0)

    out = (hidden_states_unpermute.reshape(num_tokens, top_k, H)
           * routing_weights[..., None]).sum(axis=1)
    out = out.reshape(B, S, H).astype(hidden_states.dtype)

    result = dict(
        token_counts_by_expert=counts,
        gather_indices=gather_indices,
        topk_weights=routing_weights,
        first_gemm=first_gemm,
        intermediate=intermediate,
        second_gemm=second_gemm,
        hidden_states_unpermute=hidden_states_unpermute,
        hidden_states=out,
    )
    return result, router_logits


# ----------------------------------------------------------------------------
# Pure-JAX reference (sanity check for the Pallas path)
# ----------------------------------------------------------------------------
def _reference_forward(hidden_states, gate, gate_up_proj, down_proj,
                       top_k, norm_topk_prob=True):
    B, S, H = hidden_states.shape
    inter = down_proj.shape[-1]
    hs = hidden_states.reshape(-1, H)
    logits = hs @ gate.T
    rw = jax.nn.softmax(logits.astype(jnp.float32), axis=-1)
    rw, sel = lax.top_k(rw, top_k)
    if norm_topk_prob:
        rw = rw / rw.sum(-1, keepdims=True)
    rw = rw.astype(hs.dtype)
    x = hs[:, None, :]                                             # (T,1,H)
    w1 = gate_up_proj[sel]                                         # (T,k,2I,H)
    g1 = jnp.einsum('toh,tknh->tkn', x, w1)
    a = jax.nn.silu(g1[..., :inter]) * g1[..., inter:]
    w2 = down_proj[sel]                                            # (T,k,H,I)
    g2 = jnp.einsum('tki,tkhi->tkh', a, w2)
    out = (g2 * rw[..., None]).sum(axis=1).reshape(B, S, H)
    return out


if __name__ == "__main__":
    num_experts = 8
    hidden_size = 64
    moe_intermediate_size = 64
    top_k = 2
    batch, seq = 2, 8

    key = jax.random.PRNGKey(0)
    k1, k2, k3, k4 = jax.random.split(key, 4)
    gate_w = jax.random.normal(k1, (num_experts, hidden_size), jnp.float32) * 0.05
    gate_up_proj = jax.random.normal(
        k2, (num_experts, 2 * moe_intermediate_size, hidden_size), jnp.float32) * 0.05
    down_proj = jax.random.normal(
        k3, (num_experts, hidden_size, moe_intermediate_size), jnp.float32) * 0.05
    hidden_states = jax.random.normal(k4, (batch, seq, hidden_size), jnp.float32)

    fwd = jax.jit(functools.partial(qwen3_moe_forward,
                                    top_k=top_k, norm_topk_prob=True))
    result, router_logits = fwd(hidden_states, gate_w, gate_up_proj, down_proj)
    out = result["hidden_states"]
    jax.block_until_ready(out)

    ref = _reference_forward(hidden_states, gate_w, gate_up_proj, down_proj,
                             top_k=top_k, norm_topk_prob=True)
    assert out.shape == (batch, seq, hidden_size)
    assert result["first_gemm"].shape == (batch * seq * top_k,
                                          2 * moe_intermediate_size)
    assert result["second_gemm"].shape == (batch * seq * top_k, hidden_size)
    assert jnp.allclose(out, ref, atol=1e-3, rtol=1e-3), "mismatch vs reference"

    print("KERNEL_OK")
</pallas_src>

<mosaic_0001>
module attributes {stable_mosaic.version = 11 : i64} {
  func.func private @main(%arg0: i32) attributes {dimension_semantics = [#tpu.dimension_semantics<core_parallel>], iteration_bounds = array<i64: 2>, tpu.core_type = #tpu.core_type<sc_scalar_subcore>, window_params = []} {
    return
  }
}

module attributes {stable_mosaic.version = 11 : i64} {
  func.func private @main(%arg0: i32) attributes {dimension_semantics = [#tpu.dimension_semantics<core_parallel>], iteration_bounds = array<i64: 2>, tpu.core_type = #tpu.core_type<sc_scalar_subcore>, window_params = []} {
    return
  }
}

module attributes {stable_mosaic.version = 11 : i64} {
  func.func @_grouped_gemm_silu_kernel(%arg0: i32, %arg1: i32, %arg2: memref<9xi32, #tpu.memory_space<smem>>, %arg3: memref<9xi32, #tpu.memory_space<smem>>, %arg4: memref<32x64xf32, #tpu.memory_space<vmem>>, %arg5: memref<1x64x128xf32, #tpu.memory_space<vmem>>, %arg6: memref<32x128xf32, #tpu.memory_space<vmem>>, %arg7: memref<32x64xf32, #tpu.memory_space<vmem>>, %arg8: memref<32x128xf32, #tpu.memory_space<vmem>>) attributes {dimension_semantics = [#tpu.dimension_semantics<parallel>, #tpu.dimension_semantics<arbitrary>], iteration_bounds = array<i64: 9, 1>, scalar_prefetch = 2 : i64, scratch_operands = 1 : i64, tpu.core_type = #tpu.core_type<tc>, window_params = [{transform_indices = @transform_0, window_bounds = array<i64: 32, 64>}, {transform_indices = @transform_1, window_bounds = array<i64: 1, 64, 128>}, {transform_indices = @transform_2, window_bounds = array<i64: 32, 128>}, {transform_indices = @transform_3, window_bounds = array<i64: 32, 64>}]} {
    %c0_i32 = arith.constant 0 : i32
    %0 = arith.cmpi eq, %arg1, %c0_i32 : i32
    %1 = arith.extui %0 : i1 to i32
    %c0_i32_0 = arith.constant 0 : i32
    %2 = arith.cmpi ne, %1, %c0_i32_0 : i32
    scf.if %2 {
      %cst = arith.constant 0.000000e+00 : f32
      %11 = vector.broadcast %cst : f32 to vector<32x128xf32>
      %c0 = arith.constant 0 : index
      %c0_5 = arith.constant 0 : index
      %12 = vector.load %arg8[%c0, %c0_5] : memref<32x128xf32, #tpu.memory_space<vmem>>, vector<32x128xf32>
      tpu.vector_store %arg8[%c0, %c0_5], %11 {strides = array<i32>} : memref<32x128xf32, #tpu.memory_space<vmem>>, vector<32x128xf32>,
    } else {
    }
    %3 = arith.index_cast %arg0 : i32 to index
    %4 = memref.load %arg3[%3] : memref<9xi32, #tpu.memory_space<smem>>
    %c0_i32_1 = arith.constant 0 : i32
    %5 = arith.cmpi sgt, %4, %c0_i32_1 : i32
    %6 = arith.extui %5 : i1 to i32
    %c0_i32_2 = arith.constant 0 : i32
    %7 = arith.cmpi ne, %6, %c0_i32_2 : i32
    scf.if %7 {
      %c0 = arith.constant 0 : index
      %c0_5 = arith.constant 0 : index
      %11 = vector.load %arg8[%c0, %c0_5] : memref<32x128xf32, #tpu.memory_space<vmem>>, vector<32x128xf32>
      %c0_6 = arith.constant 0 : index
      %c0_7 = arith.constant 0 : index
      %12 = vector.load %arg4[%c0_6, %c0_7] : memref<32x64xf32, #tpu.memory_space<vmem>>, vector<32x64xf32>
      %c0_8 = arith.constant 0 : index
      %c0_9 = arith.constant 0 : index
      %c0_10 = arith.constant 0 : index
      %13 = vector.load %arg5[%c0_8, %c0_9, %c0_10] : memref<1x64x128xf32, #tpu.memory_space<vmem>>, vector<1x64x128xf32>
      %14 = vector.shape_cast %13 : vector<1x64x128xf32> to vector<64x128xf32>
      %cst = arith.constant dense<0.000000e+00> : vector<32x128xf32>
      %15 = tpu.matmul %12, %14, %cst {dimension_numbers = #tpu.dot_dimension_numbers<[1], [0], [0], [1], [0, 0, 1, 1], [], []>} : vector<32x64xf32>, vector<64x128xf32>, vector<32x128xf32> -> vector<32x128xf32>
      %16 = arith.addf %11, %15 : vector<32x128xf32>
      %c0_11 = arith.constant 0 : index
      %c0_12 = arith.constant 0 : index
      %17 = vector.load %arg8[%c0_11, %c0_12] : memref<32x128xf32, #tpu.memory_space<vmem>>, vector<32x128xf32>
      tpu.vector_store %arg8[%c0_11, %c0_12], %16 {strides = array<i32>} : memref<32x128xf32, #tpu.memory_space<vmem>>, vector<32x128xf32>,
    } else {
    }
    %c0_i32_3 = arith.constant 0 : i32
    %8 = arith.cmpi eq, %arg1, %c0_i32_3 : i32
    %9 = arith.extui %8 : i1 to i32
    %c0_i32_4 = arith.constant 0 : i32
    %10 = arith.cmpi ne, %9, %c0_i32_4 : i32
    scf.if %10 {
      %c0 = arith.constant 0 : index
      %c0_5 = arith.constant 0 : index
      %11 = vector.load %arg8[%c0, %c0_5] : memref<32x128xf32, #tpu.memory_space<vmem>>, vector<32x128xf32>
      %c0_6 = arith.constant 0 : index
      %c0_7 = arith.constant 0 : index
      %12 = vector.load %arg6[%c0_6, %c0_7] : memref<32x128xf32, #tpu.memory_space<vmem>>, vector<32x128xf32>
      tpu.vector_store %arg6[%c0_6, %c0_7], %11 {strides = array<i32>} : memref<32x128xf32, #tpu.memory_space<vmem>>, vector<32x128xf32>,
      %13 = vector.extract_strided_slice %11 {offsets = [0, 0], sizes = [32, 64], strides = [1, 1]} : vector<32x128xf32> to vector<32x64xf32>
      %14 = vector.extract_strided_slice %11 {offsets = [0, 64], sizes = [32, 64], strides = [1, 1]} : vector<32x128xf32> to vector<32x64xf32>
      %cst = arith.constant 0.000000e+00 : f32
      %15 = vector.broadcast %cst : f32 to vector<32x64xf32>
      %16 = arith.subf %15, %13 : vector<32x64xf32>
      %17 = math.exp %16 : vector<32x64xf32>
      %cst_8 = arith.constant 1.000000e+00 : f32
      %18 = vector.broadcast %cst_8 : f32 to vector<32x64xf32>
      %19 = arith.addf %18, %17 : vector<32x64xf32>
      %cst_9 = arith.constant 1.000000e+00 : f32
      %20 = vector.broadcast %cst_9 : f32 to vector<32x64xf32>
      %21 = arith.divf %20, %19 : vector<32x64xf32>
      %22 = arith.mulf %13, %21 : vector<32x64xf32>
      %23 = arith.mulf %22, %14 : vector<32x64xf32>
      %c0_10 = arith.constant 0 : index
      %c0_11 = arith.constant 0 : index
      %24 = vector.load %arg7[%c0_10, %c0_11] : memref<32x64xf32, #tpu.memory_space<vmem>>, vector<32x64xf32>
      tpu.vector_store %arg7[%c0_10, %c0_11], %23 {strides = array<i32>} : memref<32x64xf32, #tpu.memory_space<vmem>>, vector<32x64xf32>,
    } else {
    }
    return
  }
  func.func @transform_0(%arg0: i32, %arg1: i32, %arg2: memref<9xi32, #tpu.memory_space<smem>>, %arg3: memref<9xi32, #tpu.memory_space<smem>>) -> (i32, i32) {
    %c0_i32 = arith.constant 0 : i32
    return %arg0, %arg1 : i32, i32
  }
  func.func @transform_1(%arg0: i32, %arg1: i32, %arg2: memref<9xi32, #tpu.memory_space<smem>>, %arg3: memref<9xi32, #tpu.memory_space<smem>>) -> (i32, i32, i32) {
    %0 = arith.index_cast %arg0 : i32 to index
    %1 = memref.load %arg2[%0] : memref<9xi32, #tpu.memory_space<smem>>
    %c0_i32 = arith.constant 0 : i32
    %c0_i32_0 = arith.constant 0 : i32
    return %1, %arg1, %c0_i32 : i32, i32, i32
  }
  func.func @transform_2(%arg0: i32, %arg1: i32, %arg2: memref<9xi32, #tpu.memory_space<smem>>, %arg3: memref<9xi32, #tpu.memory_space<smem>>) -> (i32, i32) {
    %c0_i32 = arith.constant 0 : i32
    %c0_i32_0 = arith.constant 0 : i32
    return %arg0, %c0_i32 : i32, i32
  }
  func.func @transform_3(%arg0: i32, %arg1: i32, %arg2: memref<9xi32, #tpu.memory_space<smem>>, %arg3: memref<9xi32, #tpu.memory_space<smem>>) -> (i32, i32) {
    %c0_i32 = arith.constant 0 : i32
    %c0_i32_0 = arith.constant 0 : i32
    return %arg0, %c0_i32 : i32, i32
  }
}

module attributes {stable_mosaic.version = 11 : i64} {
  func.func @_grouped_gemm_kernel(%arg0: i32, %arg1: i32, %arg2: memref<9xi32, #tpu.memory_space<smem>>, %arg3: memref<9xi32, #tpu.memory_space<smem>>, %arg4: memref<32x64xf32, #tpu.memory_space<vmem>>, %arg5: memref<1x64x64xf32, #tpu.memory_space<vmem>>, %arg6: memref<32x64xf32, #tpu.memory_space<vmem>>, %arg7: memref<32x64xf32, #tpu.memory_space<vmem>>) attributes {dimension_semantics = [#tpu.dimension_semantics<parallel>, #tpu.dimension_semantics<arbitrary>], iteration_bounds = array<i64: 9, 1>, scalar_prefetch = 2 : i64, scratch_operands = 1 : i64, tpu.core_type = #tpu.core_type<tc>, window_params = [{transform_indices = @transform_0, window_bounds = array<i64: 32, 64>}, {transform_indices = @transform_1, window_bounds = array<i64: 1, 64, 64>}, {transform_indices = @transform_2, window_bounds = array<i64: 32, 64>}]} {
    %c0_i32 = arith.constant 0 : i32
    %0 = arith.cmpi eq, %arg1, %c0_i32 : i32
    %1 = arith.extui %0 : i1 to i32
    %c0_i32_0 = arith.constant 0 : i32
    %2 = arith.cmpi ne, %1, %c0_i32_0 : i32
    scf.if %2 {
      %cst = arith.constant 0.000000e+00 : f32
      %11 = vector.broadcast %cst : f32 to vector<32x64xf32>
      %c0 = arith.constant 0 : index
      %c0_5 = arith.constant 0 : index
      %12 = vector.load %arg7[%c0, %c0_5] : memref<32x64xf32, #tpu.memory_space<vmem>>, vector<32x64xf32>
      tpu.vector_store %arg7[%c0, %c0_5], %11 {strides = array<i32>} : memref<32x64xf32, #tpu.memory_space<vmem>>, vector<32x64xf32>,
    } else {
    }
    %3 = arith.index_cast %arg0 : i32 to index
    %4 = memref.load %arg3[%3] : memref<9xi32, #tpu.memory_space<smem>>
    %c0_i32_1 = arith.constant 0 : i32
    %5 = arith.cmpi sgt, %4, %c0_i32_1 : i32
    %6 = arith.extui %5 : i1 to i32
    %c0_i32_2 = arith.constant 0 : i32
    %7 = arith.cmpi ne, %6, %c0_i32_2 : i32
    scf.if %7 {
      %c0 = arith.constant 0 : index
      %c0_5 = arith.constant 0 : index
      %11 = vector.load %arg7[%c0, %c0_5] : memref<32x64xf32, #tpu.memory_space<vmem>>, vector<32x64xf32>
      %c0_6 = arith.constant 0 : index
      %c0_7 = arith.constant 0 : index
      %12 = vector.load %arg4[%c0_6, %c0_7] : memref<32x64xf32, #tpu.memory_space<vmem>>, vector<32x64xf32>
      %c0_8 = arith.constant 0 : index
      %c0_9 = arith.constant 0 : index
      %c0_10 = arith.constant 0 : index
      %13 = vector.load %arg5[%c0_8, %c0_9, %c0_10] : memref<1x64x64xf32, #tpu.memory_space<vmem>>, vector<1x64x64xf32>
      %14 = vector.shape_cast %13 : vector<1x64x64xf32> to vector<64x64xf32>
      %cst = arith.constant dense<0.000000e+00> : vector<32x64xf32>
      %15 = tpu.matmul %12, %14, %cst {dimension_numbers = #tpu.dot_dimension_numbers<[1], [0], [0], [1], [0, 0, 1, 1], [], []>} : vector<32x64xf32>, vector<64x64xf32>, vector<32x64xf32> -> vector<32x64xf32>
      %16 = arith.addf %11, %15 : vector<32x64xf32>
      %c0_11 = arith.constant 0 : index
      %c0_12 = arith.constant 0 : index
      %17 = vector.load %arg7[%c0_11, %c0_12] : memref<32x64xf32, #tpu.memory_space<vmem>>, vector<32x64xf32>
      tpu.vector_store %arg7[%c0_11, %c0_12], %16 {strides = array<i32>} : memref<32x64xf32, #tpu.memory_space<vmem>>, vector<32x64xf32>,
    } else {
    }
    %c0_i32_3 = arith.constant 0 : i32
    %8 = arith.cmpi eq, %arg1, %c0_i32_3 : i32
    %9 = arith.extui %8 : i1 to i32
    %c0_i32_4 = arith.constant 0 : i32
    %10 = arith.cmpi ne, %9, %c0_i32_4 : i32
    scf.if %10 {
      %c0 = arith.constant 0 : index
      %c0_5 = arith.constant 0 : index
      %11 = vector.load %arg7[%c0, %c0_5] : memref<32x64xf32, #tpu.memory_space<vmem>>, vector<32x64xf32>
      %c0_6 = arith.constant 0 : index
      %c0_7 = arith.constant 0 : index
      %12 = vector.load %arg6[%c0_6, %c0_7] : memref<32x64xf32, #tpu.memory_space<vmem>>, vector<32x64xf32>
      tpu.vector_store %arg6[%c0_6, %c0_7], %11 {strides = array<i32>} : memref<32x64xf32, #tpu.memory_space<vmem>>, vector<32x64xf32>,
    } else {
    }
    return
  }
  func.func @transform_0(%arg0: i32, %arg1: i32, %arg2: memref<9xi32, #tpu.memory_space<smem>>, %arg3: memref<9xi32, #tpu.memory_space<smem>>) -> (i32, i32) {
    %c0_i32 = arith.constant 0 : i32
    return %arg0, %arg1 : i32, i32
  }
  func.func @transform_1(%arg0: i32, %arg1: i32, %arg2: memref<9xi32, #tpu.memory_space<smem>>, %arg3: memref<9xi32, #tpu.memory_space<smem>>) -> (i32, i32, i32) {
    %0 = arith.index_cast %arg0 : i32 to index
    %1 = memref.load %arg2[%0] : memref<9xi32, #tpu.memory_space<smem>>
    %c0_i32 = arith.constant 0 : i32
    %c0_i32_0 = arith.constant 0 : i32
    return %1, %arg1, %c0_i32 : i32, i32, i32
  }
  func.func @transform_2(%arg0: i32, %arg1: i32, %arg2: memref<9xi32, #tpu.memory_space<smem>>, %arg3: memref<9xi32, #tpu.memory_space<smem>>) -> (i32, i32) {
    %c0_i32 = arith.constant 0 : i32
    %c0_i32_0 = arith.constant 0 : i32
    return %arg0, %c0_i32 : i32, i32
  }
}

</mosaic_0001>

<llo_original>
// kernel: custom-call
$region0: #{custom-call}
  %s0 = inlined_call_operand.vmem [shape: u32[9], index: 0, kind: output, shape index: {}]

// kernel: qwen3_moe_forward.3
$region0: #{qwen3_moe_forward.3}
  #allocation0 [shape = 'u32[]', space=smem, size = 0x4, offset = 0x4, fixed_abs, tag = 'smem constant byte address 0x4 - core index']
  #allocation1 [shape = 'u32[144,128]{1,0:T(1,128)}', space=vmem, size = 0x12000, scoped, tag = 'internal scratch']
  #allocation2 [shape = 'f32[32,64]{1,0:T(8,128)}', space=vmem, size = 0x4000, scoped, tag = 'scratch operand']
  #allocation3 [shape = 's32[1]{0}', space=sflag, size = 0x4, scoped, tag = 'scoped memory for qwen3_moe_forward.3']
  #allocation4 [shape = 'u8[512]{0}', space=smem, size = 0x200, scoped, tag = 'prefetched SMEM operand 0']
  #allocation5 [shape = 'u8[512]{0}', space=smem, size = 0x200, scoped, tag = 'prefetched SMEM operand 1']
  %s0 = inlined_call_operand.vmem [shape: s32[9], index: 0, kind: input, shape index: {}]
  %s1 = inlined_call_operand.vmem [shape: s32[9], index: 1, kind: input, shape index: {}]
  %s2 = inlined_call_operand.vmem [shape: f32[288,64], index: 2, kind: input, shape index: {}]
  %s3 = inlined_call_operand.vmem [shape: f32[8,64,64], index: 3, kind: input, shape index: {}]
  %s4 = inlined_call_operand.vmem [shape: f32[288,64], index: 4, kind: output, shape index: {}]
  %s5 = sld [smem:[#allocation0]]
  $region53: #{qwen3_moe_forward.3} parent=0
    _
  %s7 = ssub.s32 1, %s5
  %s8 = scalar_select 0, %s7, %s5
  %s9 = sshll.u32 %s0, 4
  %s10 = int_to_ptr.vmem [resolvable:$true] %s9
  %12 = dma.vmem_to_smem %s10, 16, [#allocation4], [#allocation3]
  %s13 = sshll.u32 %s1, 4
  %s14 = int_to_ptr.vmem [resolvable:$true] %s13
  %16 = dma.vmem_to_smem %s14, 16, [#allocation5], [#allocation3]
  %17 = dma.done [#allocation3], 32
  %18 = sfence
  loop: start=0, step=1, limit=11
  $region2: #{qwen3_moe_forward.3} parent=0 // loop_pre_header
    _
  $region3: #{qwen3_moe_forward.3} parent=0 // loop_header
    %s20 = sphi 0, %s24
    %p21 = scmp.ge.s32.totalorder %s20, 11
    %s27 = sphi 0, %s39
    %s28 = sphi 0, %s35
    %s29 = sphi 0, %s27
    %s30 = sphi 0, %s28
    %s31 = sphi 0, %s29
    %s32 = sphi 0, %s30
    %s44 = sphi 0, %s46
    %s47 = sphi 0, %s44
    %s48 = sphi 0, %s47
    %s64 = sphi 0, %s48
    %s74 = sphi 0, %s76
    %s77 = sphi 0, %s74
    %s78 = sphi 0, %s77
    %s94 = sphi 0, %s78
    %s100 = sphi 0, %s102
    %s103 = sphi 0, %s100
    %s104 = sphi 0, %s103
    %s120 = sphi 0, %s104
  $region4: #{qwen3_moe_forward.3} parent=0 // loop_header_branch
    %23 = sbr.rel (%p21) target = $region8
  $region5: #{qwen3_moe_forward.3} parent=0 // loop_body
    %s25 = ssub.s32 %s20, 1
    %s26 = ssub.s32 %s20, 2
    %s33 = sadd.s32 1, %s28
    %p34 = scmp.ge.s32.totalorder %s33, 1
    %s35 = scalar_select %p34, 0, %s33
    %s36 = sadd.s32 1, %s27
    %s37 = scalar_select %p34, %s36, %s27
    %p38 = scmp.ge.s32.totalorder %s37, 9
    %s39 = scalar_select %p38, 0, %s37
    %s40 = ssub.s32 %s27, %s39
    %s41 = ssub.s32 %s28, %s35
    %s42 = sor.u32 %s40, %s41
    %p43 = scmp.eq.s32.totalorder %s42, 0
    %s45 = sadd.s32 %s44, 1
    %s46 = scalar_select %p43, %s44, %s45
    %p49 = pneg %p43
    %p50 = scmp.eq.s32.totalorder %s20, 8
    %p51 = por %p49, %p50
    %p52 = scmp.ne.s32.totalorder %s44, %s47
    %p53 = scmp.eq.s32.totalorder %s20, 0
    %p54 = por %p52, %p53
    %p55 = scmp.ne.s32.totalorder %s44, %s47
    %p56 = scmp.eq.s32.totalorder %s25, 8
    %p57 = por %p55, %p56
    %p58 = scmp.ne.s32.totalorder %s47, %s48
    %p59 = scmp.eq.s32.totalorder %s25, 0
    %p60 = por %p58, %p59
    %p61 = scmp.ne.s32.totalorder %s47, %s48
    %p62 = scmp.eq.s32.totalorder %s26, 8
    %p63 = por %p61, %p62
    %p65 = scmp.ne.s32.totalorder %s48, %s64
    %p66 = scmp.eq.s32.totalorder %s26, 0
    %p67 = por %p65, %p66
    %s68 = sld [smem:[#allocation4 + %s27]]
    %s69 = sld [smem:[#allocation4 + %s39]]
    %s70 = ssub.s32 %s68, %s69
    %s71 = ssub.s32 %s28, %s35
    %s72 = sor.u32 %s70, %s71
    %p73 = scmp.eq.s32.totalorder %s72, 0
    %s75 = sadd.s32 %s74, 1
    %s76 = scalar_select %p73, %s74, %s75
    %p79 = pneg %p73
    %p80 = scmp.eq.s32.totalorder %s20, 8
    %p81 = por %p79, %p80
    %p82 = scmp.ne.s32.totalorder %s74, %s77
    %p83 = scmp.eq.s32.totalorder %s20, 0
    %p84 = por %p82, %p83
    %p85 = scmp.ne.s32.totalorder %s74, %s77
    %p86 = scmp.eq.s32.totalorder %s25, 8
    %p87 = por %p85, %p86
    %p88 = scmp.ne.s32.totalorder %s77, %s78
    %p89 = scmp.eq.s32.totalorder %s25, 0
    %p90 = por %p88, %p89
    %p91 = scmp.ne.s32.totalorder %s77, %s78
    %p92 = scmp.eq.s32.totalorder %s26, 8
    %p93 = por %p91, %p92
    %p95 = scmp.ne.s32.totalorder %s78, %s94
    %p96 = scmp.eq.s32.totalorder %s26, 0
    %p97 = por %p95, %p96
    %s98 = ssub.s32 %s27, %s39
    %p99 = scmp.eq.s32.totalorder %s98, 0
    %s101 = sadd.s32 %s100, 1
    %s102 = scalar_select %p99, %s100, %s101
    %p105 = pneg %p99
    %p106 = scmp.eq.s32.totalorder %s20, 8
    %p107 = por %p105, %p106
    %p108 = scmp.ne.s32.totalorder %s100, %s103
    %p109 = scmp.eq.s32.totalorder %s20, 0
    %p110 = por %p108, %p109
    %p111 = scmp.ne.s32.totalorder %s100, %s103
    %p112 = scmp.eq.s32.totalorder %s25, 8
    %p113 = por %p111, %p112
    %p114 = scmp.ne.s32.totalorder %s103, %s104
    %p115 = scmp.eq.s32.totalorder %s25, 0
    %p116 = por %p114, %p115
    %p117 = scmp.ne.s32.totalorder %s103, %s104
    %p118 = scmp.eq.s32.totalorder %s26, 8
    %p119 = por %p117, %p118
    %p121 = scmp.ne.s32.totalorder %s104, %s120
    %p122 = scmp.eq.s32.totalorder %s26, 0
    %p123 = por %p121, %p122
    %p124 = scmp.le.s32.totalorder 1, %s20
    %p125 = scmp.lt.s32.totalorder %s20, 10
    %p126 = pnand %p124, %p125
    %p127 = pneg %p126
    // Predicated region
    $region9: #{qwen3_moe_forward.3} parent=5 // pred_check
      _
    $region10: #{qwen3_moe_forward.3} parent=5 // pred_check_branch
      %129 = sbr.rel (%p126) target = $region12
    $region11: #{qwen3_moe_forward.3} parent=5 // pred_region
      %s130 = ssub.s32 %s20, 1
    $region12: #{qwen3_moe_forward.3} parent=5 // pred_fallthru
      _
    %p131 = scmp.lt.s32.totalorder %s20, 9
    // Predicated region
    $region13: #{qwen3_moe_forward.3} parent=5 // pred_check
      %p132 = pneg %p131
    $region14: #{qwen3_moe_forward.3} parent=5 // pred_check_branch
      %134 = sbr.rel (%p132) target = $region16
    $region15: #{qwen3_moe_forward.3} parent=5 // pred_region
      // Predicated region
      $region17: #{qwen3_moe_forward.3} parent=15 // pred_check
        %p135 = pneg %p54
      $region18: #{qwen3_moe_forward.3} parent=15 // pred_check_branch
        %137 = sbr.rel (%p135) target = $region20
      $region19: #{qwen3_moe_forward.3} parent=15 // pred_region
        %s138 = smul.u32 4, %s27
        %p139 = scmp.lt.s32.totalorder %s138, 35
        %s140 = scalar_select %p139, %s138, 35
        %p141 = scmp.lt.s32.totalorder %s28, 0
        %s142 = scalar_select %p141, %s28, 0
        %s143 = sadd.s32 %s142, %s140
        %s144 = smul.addr %s143, 8
        %s145 = scalar_lea.vmem %s2, %s144
        %s146 = smul.u32 4, %s27
      $region20: #{qwen3_moe_forward.3} parent=15 // pred_fallthru
        _
      // Predicated region
      $region21: #{qwen3_moe_forward.3} parent=15 // pred_check
        %p147 = pneg %p84
      $region22: #{qwen3_moe_forward.3} parent=15 // pred_check_branch
        %149 = sbr.rel (%p147) target = $region24
      $region23: #{qwen3_moe_forward.3} parent=15 // pred_region
        %s150 = sld [smem:[#allocation4 + %s27]]
        %s151 = smul.u32 8, %s28
        %p152 = scmp.lt.s32.totalorder %s150, 7
        %s153 = scalar_select %p152, %s150, 7
        %p154 = scmp.lt.s32.totalorder %s151, 7
        %s155 = scalar_select %p154, %s151, 7
        %s156 = smul.addr %s153, 8
        %s157 = sadd.s32 %s155, %s156
        %s158 = smul.addr %s157, 8
        %s159 = scalar_lea.vmem %s3, %s158
        %s160 = sld [smem:[#allocation4 + %s27]]
        %s161 = smul.u32 8, %s28
      $region24: #{qwen3_moe_forward.3} parent=15 // pred_fallthru
        _
    $region16: #{qwen3_moe_forward.3} parent=5 // pred_fallthru
      _
    %p162 = scmp.le.s32.totalorder 1, %s20
    %p163 = scmp.lt.s32.totalorder %s20, 10
    %p164 = pnand %p162, %p163
    %p165 = pneg %p164
    // Predicated region
    $region25: #{qwen3_moe_forward.3} parent=5 // pred_check
      _
    $region26: #{qwen3_moe_forward.3} parent=5 // pred_check_branch
      %167 = sbr.rel (%p164) target = $region28
    $region27: #{qwen3_moe_forward.3} parent=5 // pred_region
      %s168 = ssub.s32 %s20, 1
      %s169 = smul.u32 4, %s29
      %p170 = scmp.lt.s32.totalorder %s169, 35
      %s171 = scalar_select %p170, %s169, 35
      %p172 = scmp.lt.s32.totalorder %s30, 0
      %s173 = scalar_select %p172, %s30, 0
      %s174 = sadd.s32 %s173, %s171
      %s175 = smul.addr %s174, 8
      %s176 = scalar_lea.vmem %s2, %s175
      %p177 = pneg %p60
      %p178 = pneg %p57
      %s179 = sld [smem:[#allocation4 + %s29]]
      %s180 = smul.u32 8, %s30
      %p181 = scmp.lt.s32.totalorder %s179, 7
      %s182 = scalar_select %p181, %s179, 7
      %p183 = scmp.lt.s32.totalorder %s180, 7
      %s184 = scalar_select %p183, %s180, 7
      %s185 = smul.addr %s182, 8
      %s186 = sadd.s32 %s184, %s185
      %s187 = smul.addr %s186, 8
      %s188 = scalar_lea.vmem %s3, %s187
      %p189 = pneg %p90
      %p190 = pneg %p87
      %p191 = pneg %p116
      %p192 = pneg %p113
      %s193 = smul.u32 4, %s29
      %p194 = scmp.lt.s32.totalorder %s193, 35
      %s195 = scalar_select %p194, %s193, 35
      %s196 = smul.addr %s195, 8
      %s197 = scalar_lea.vmem %s4, %s196
      %s198 = smul.u32 4, %s29
      %p199 = scmp.lt.s32.totalorder %s198, 35
      %s200 = scalar_select %p199, %s198, 35
      %p201 = scmp.lt.s32.totalorder %s30, 0
      %s202 = scalar_select %p201, %s30, 0
      %s203 = sadd.s32 %s202, %s200
      %s204 = smul.addr %s203, 8
      %s205 = scalar_lea.vmem %s2, %s204
      %s206 = smul.u32 4, %s29
      %s207 = sld [smem:[#allocation4 + %s29]]
      %s208 = smul.u32 8, %s30
      %p209 = scmp.lt.s32.totalorder %s207, 7
      %s210 = scalar_select %p209, %s207, 7
      %p211 = scmp.lt.s32.totalorder %s208, 7
      %s212 = scalar_select %p211, %s208, 7
      %s213 = smul.addr %s210, 8
      %s214 = sadd.s32 %s212, %s213
      %s215 = smul.addr %s214, 8
      %s216 = scalar_lea.vmem %s3, %s215
      %s217 = sld [smem:[#allocation4 + %s29]]
      %s218 = smul.u32 8, %s30
      %s219 = smul.u32 4, %s29
      %p220 = scmp.lt.s32.totalorder %s219, 35
      %s221 = scalar_select %p220, %s219, 35
      %s222 = smul.addr %s221, 8
      %s223 = scalar_lea.vmem %s4, %s222
      %s224 = smul.u32 4, %s29
      %p225 = scmp.eq.s32.totalorder %s30, 0
      // Predicated region
      $region29: #{qwen3_moe_forward.3} parent=27 // pred_check
        %p226 = pneg %p225
      $region30: #{qwen3_moe_forward.3} parent=27 // pred_check_branch
        %228 = sbr.rel (%p226) target = $region32
      $region31: #{qwen3_moe_forward.3} parent=27 // pred_region
        %vm229 = vcmask 523264
        %230 = vst.msk [vmem:[#allocation2] sm:$0xff] %vm229, 0.0
        %231 = vst.msk [vmem:[#allocation2 + $0x8] sm:$0xff] %vm229, 0.0
        %232 = vst.msk [vmem:[#allocation2 + $0x10] sm:$0xff] %vm229, 0.0
        %233 = vst.msk [vmem:[#allocation2 + $0x18] sm:$0xff] %vm229, 0.0
      $region32: #{qwen3_moe_forward.3} parent=27 // pred_fallthru
        _
      %s234 = sld [smem:[#allocation5 + %s29]]
      %p235 = scmp.gt.s32.totalorder %s234, 0
      // Predicated region
      $region33: #{qwen3_moe_forward.3} parent=27 // pred_check
        %p236 = pneg %p235
      $region34: #{qwen3_moe_forward.3} parent=27 // pred_check_branch
        %238 = sbr.rel (%p236) target = $region36
      $region35: #{qwen3_moe_forward.3} parent=27 // pred_region
        %v239 = vld [vmem:[#allocation2] sm:$0xff]
        %v240 = vld [vmem:[#allocation2 + $0x8] sm:$0xff]
        %v241 = vld [vmem:[#allocation2 + $0x10] sm:$0xff]
        %v242 = vld [vmem:[#allocation2 + $0x18] sm:$0xff]
        %v243 = vld [vmem:[%s205] sm:$0xff]
        %v244 = vld [vmem:[%s205 + $0x8] sm:$0xff]
        %v245 = vld [vmem:[%s205 + $0x10] sm:$0xff]
        %v246 = vld [vmem:[%s205 + $0x18] sm:$0xff]
        %v247 = vld [vmem:[%s216] sm:$0xff]
        %v248 = vld [vmem:[%s216 + $0x8] sm:$0xff]
        %v249 = vld [vmem:[%s216 + $0x10] sm:$0xff]
        %v250 = vld [vmem:[%s216 + $0x18] sm:$0xff]
        %v251 = vld [vmem:[%s216 + $0x20] sm:$0xff]
        %v252 = vld [vmem:[%s216 + $0x28] sm:$0xff]
        %v253 = vld [vmem:[%s216 + $0x30] sm:$0xff]
        %v254 = vld [vmem:[%s216 + $0x38] sm:$0xff]
        %vm255 = vcmask 523264
        %v257 = vsel %vm255, %v243, 0
        %v260 = vsel %vm255, %v244, 0
        %v263 = vsel %vm255, %v245, 0
        %v266 = vsel %vm255, %v246, 0
        %268 = vmatprep.subr.mxu0 0.0
        %269 = vmatpush1.msra.mxu0 0.0
        %270 = vmatprep.subr.mxu0 0.0
        %271 = vmatpush1.msra.mxu0 0.0
        %272 = vmatprep.subr.mxu0 0.0
        %273 = vmatpush1.msra.mxu0 0.0
        %274 = vmatprep.subr.mxu0 0.0
        %275 = vmatpush1.msra.mxu0 0.0
        %276 = vmatprep.subr.mxu0 0.0
        %277 = vmatpush1.msra.mxu0 0.0
        %278 = vmatprep.subr.mxu0 0.0
        %279 = vmatpush1.msra.mxu0 0.0
        %280 = vmatprep.subr.mxu0 0.0
        %281 = vmatpush1.msra.mxu0 0.0
        %282 = vmatprep.subr.mxu0 0.0
        %283 = vmatpush1.msra.mxu0 0.0
        %284 = vmatprep.subr.mxu0 0.0
        %285 = vmatpush1.msra.mxu0 %v254
        %286 = vmatprep.subr.mxu0 0.0
        %287 = vmatpush1.msra.mxu0 %v253
        %288 = vmatprep.subr.mxu0 0.0
        %289 = vmatpush1.msra.mxu0 %v252
        %290 = vmatprep.subr.mxu0 0.0
        %291 = vmatpush1.msra.mxu0 %v251
        %292 = vmatprep.subr.mxu0 0.0
        %293 = vmatpush1.msra.mxu0 %v250
        %294 = vmatprep.subr.mxu0 0.0
        %295 = vmatpush1.msra.mxu0 %v249
        %296 = vmatprep.subr.mxu0 0.0
        %297 = vmatpush1.msra.mxu0 %v248
        %298 = vmatprep.subr.mxu0 0.0
        %299 = vmatpush1.msra.mxu0 %v247
        %300 = vmatprep.subr.mxu0 0.0
        %301 = vmatpush2.msra.mxu0 0.0
        %302 = vmatprep.subr.mxu0 0.0
        %303 = vmatpush2.msra.mxu0 0.0
        %304 = vmatprep.subr.mxu0 0.0
        %305 = vmatpush2.msra.mxu0 0.0
        %306 = vmatprep.subr.mxu0 0.0
        %307 = vmatpush2.msra.mxu0 0.0
        %308 = vmatprep.subr.mxu0 0.0
        %309 = vmatpush2.msra.mxu0 0.0
        %310 = vmatprep.subr.mxu0 0.0
        %311 = vmatpush2.msra.mxu0 0.0
        %312 = vmatprep.subr.mxu0 0.0
        %313 = vmatpush2.msra.mxu0 0.0
        %314 = vmatprep.subr.mxu0 0.0
        %315 = vmatpush2.msra.mxu0 0.0
        %316 = vmatprep.subr.mxu0 0.0
        %317 = vmatpush2.msra.mxu0 0.0
        %318 = vmatprep.subr.mxu0 0.0
        %319 = vmatpush2.msra.mxu0 0.0
        %320 = vmatprep.subr.mxu0 0.0
        %321 = vmatpush2.msra.mxu0 0.0
        %322 = vmatprep.subr.mxu0 0.0
        %323 = vmatpush2.msra.mxu0 0.0
        %324 = vmatprep.subr.mxu0 0.0
        %325 = vmatpush2.msra.mxu0 0.0
        %326 = vmatprep.subr.mxu0 0.0
        %327 = vmatpush2.msra.mxu0 0.0
        %328 = vmatprep.subr.mxu0 0.0
        %329 = vmatpush2.msra.mxu0 0.0
        %330 = vmatprep.subr.mxu0 0.0
        %331 = vmatpush2.msra.mxu0 0.0
        %332 = vmatprep.mubr.f32.mxu0 0.0
        %333 = vmatmul.mubr.f32.gmra.mxu0 %v257
        %v334 = vpop.f32.mrf.mxu0
        %v335 = vadd.f32 0.0, %v334
        %v336 = vpop.f32.mrf.mxu0
        %337 = vmatprep.mubr.f32.mxu0 0.0
        %338 = vmatmul.mubr.f32.gmra.mxu0 %v260
        %v339 = vpop.f32.mrf.mxu0
        %v340 = vadd.f32 0.0, %v339
        %v341 = vpop.f32.mrf.mxu0
        %342 = vmatprep.mubr.f32.mxu0 0.0
        %343 = vmatmul.mubr.f32.gmra.mxu0 %v263
        %v344 = vpop.f32.mrf.mxu0
        %v345 = vadd.f32 0.0, %v344
        %v346 = vpop.f32.mrf.mxu0
        %347 = vmatprep.mubr.f32.mxu0 0.0
        %348 = vmatmul.mubr.f32.gmra.mxu0 %v266
        %v349 = vpop.f32.mrf.mxu0
        %v350 = vadd.f32 0.0, %v349
        %v351 = vpop.f32.mrf.mxu0
        %352 = vdwg.mxu0
        %v353 = vadd.f32 %v239, %v335
        %v354 = vadd.f32 %v240, %v340
        %v355 = vadd.f32 %v241, %v345
        %v356 = vadd.f32 %v242, %v350
        %357 = vst.msk [vmem:[#allocation2] sm:$0xff] %vm255, %v353
        %358 = vst.msk [vmem:[#allocation2 + $0x8] sm:$0xff] %vm255, %v354
        %359 = vst.msk [vmem:[#allocation2 + $0x10] sm:$0xff] %vm255, %v355
        %360 = vst.msk [vmem:[#allocation2 + $0x18] sm:$0xff] %vm255, %v356
      $region36: #{qwen3_moe_forward.3} parent=27 // pred_fallthru
        _
      // Predicated region
      $region37: #{qwen3_moe_forward.3} parent=27 // pred_check
        %p361 = pneg %p225
      $region38: #{qwen3_moe_forward.3} parent=27 // pred_check_branch
        %363 = sbr.rel (%p361) target = $region40
      $region39: #{qwen3_moe_forward.3} parent=27 // pred_region
        %v364 = vld [vmem:[#allocation2] sm:$0xff]
        %v365 = vld [vmem:[#allocation2 + $0x8] sm:$0xff]
        %v366 = vld [vmem:[#allocation2 + $0x10] sm:$0xff]
        %v367 = vld [vmem:[#allocation2 + $0x18] sm:$0xff]
        %vm368 = vcmask 523264
        %369 = vst.msk [vmem:[%s223] sm:$0xff] %vm368, %v364
        %370 = vst.msk [vmem:[%s223 + $0x8] sm:$0xff] %vm368, %v365
        %371 = vst.msk [vmem:[%s223 + $0x10] sm:$0xff] %vm368, %v366
        %372 = vst.msk [vmem:[%s223 + $0x18] sm:$0xff] %vm368, %v367
      $region40: #{qwen3_moe_forward.3} parent=27 // pred_fallthru
        _
      %s373 = smul.u32 4, %s29
      %p374 = scmp.lt.s32.totalorder %s373, 35
      %s375 = scalar_select %p374, %s373, 35
      %s376 = smul.addr %s375, 8
      %s377 = scalar_lea.vmem %s4, %s376
      // Predicated region
      $region41: #{qwen3_moe_forward.3} parent=27 // pred_check
        %p378 = pneg %p113
      $region42: #{qwen3_moe_forward.3} parent=27 // pred_check_branch
        %380 = sbr.rel (%p378) target = $region44
      $region43: #{qwen3_moe_forward.3} parent=27 // pred_region
        %s381 = smul.u32 4, %s29
      $region44: #{qwen3_moe_forward.3} parent=27 // pred_fallthru
        _
    $region28: #{qwen3_moe_forward.3} parent=5 // pred_fallthru
      _
    %p382 = scmp.le.s32.totalorder 2, %s20
    // Predicated region
    $region45: #{qwen3_moe_forward.3} parent=5 // pred_check
      %p383 = pneg %p382
    $region46: #{qwen3_moe_forward.3} parent=5 // pred_check_branch
      %385 = sbr.rel (%p383) target = $region48
    $region47: #{qwen3_moe_forward.3} parent=5 // pred_region
      %s386 = ssub.s32 %s20, 2
      // Predicated region
      $region49: #{qwen3_moe_forward.3} parent=47 // pred_check
        %p387 = pneg %p119
      $region50: #{qwen3_moe_forward.3} parent=47 // pred_check_branch
        %389 = sbr.rel (%p387) target = $region52
      $region51: #{qwen3_moe_forward.3} parent=47 // pred_region
        %s390 = smul.u32 4, %s31
        %p391 = scmp.lt.s32.totalorder %s390, 35
        %s392 = scalar_select %p391, %s390, 35
        %s393 = smul.addr %s392, 8
        %s394 = scalar_lea.vmem %s4, %s393
      $region52: #{qwen3_moe_forward.3} parent=47 // pred_fallthru
        _
    $region48: #{qwen3_moe_forward.3} parent=5 // pred_fallthru
      _
  $region6: #{qwen3_moe_forward.3} parent=0 // loop_footer
    %s24 = sadd.s32 1, %s20
  $region7: #{qwen3_moe_forward.3} parent=0 // loop_footer_branch
    %19 = sbr.rel target = $region3
  $region8: #{qwen3_moe_forward.3} parent=0 // loop_exit
    _

// kernel: qwen3_moe_forward.2
$region0: #{qwen3_moe_forward.2}
  #allocation0 [shape = 'u32[]', space=smem, size = 0x4, offset = 0x4, fixed_abs, tag = 'smem constant byte address 0x4 - core index']
  #allocation1 [shape = 'u32[144,128]{1,0:T(1,128)}', space=vmem, size = 0x12000, scoped, tag = 'internal scratch']
  #allocation2 [shape = 'f32[32,128]{1,0:T(8,128)}', space=vmem, size = 0x4000, scoped, tag = 'scratch operand']
  #allocation3 [shape = 's32[1]{0}', space=sflag, size = 0x4, scoped, tag = 'scoped memory for qwen3_moe_forward.2']
  #allocation4 [shape = 'u8[512]{0}', space=smem, size = 0x200, scoped, tag = 'prefetched SMEM operand 0']
  #allocation5 [shape = 'u8[512]{0}', space=smem, size = 0x200, scoped, tag = 'prefetched SMEM operand 1']
  %s0 = inlined_call_operand.vmem [shape: s32[9], index: 0, kind: input, shape index: {}]
  %s1 = inlined_call_operand.vmem [shape: s32[9], index: 1, kind: input, shape index: {}]
  %s2 = inlined_call_operand.vmem [shape: f32[288,64], index: 2, kind: input, shape index: {}]
  %s3 = inlined_call_operand.vmem [shape: f32[8,64,128], index: 3, kind: input, shape index: {}]
  %s4 = inlined_call_operand.vmem [shape: f32[288,128], index: 4, kind: output, shape index: {0}]
  %s5 = inlined_call_operand.vmem [shape: f32[288,64], index: 5, kind: output, shape index: {1}]
  %6 = xla_tuple %s4, %s5
  %s7 = sld [smem:[#allocation0]]
  $region61: #{qwen3_moe_forward.2} parent=0
    _
  %s9 = ssub.s32 1, %s7
  %s10 = scalar_select 0, %s9, %s7
  %s11 = sshll.u32 %s0, 4
  %s12 = int_to_ptr.vmem [resolvable:$true] %s11
  %14 = dma.vmem_to_smem %s12, 16, [#allocation4], [#allocation3]
  %s15 = sshll.u32 %s1, 4
  %s16 = int_to_ptr.vmem [resolvable:$true] %s15
  %18 = dma.vmem_to_smem %s16, 16, [#allocation5], [#allocation3]
  %19 = dma.done [#allocation3], 32
  %20 = sfence
  loop: start=0, step=1, limit=11
  $region2: #{qwen3_moe_forward.2} parent=0 // loop_pre_header
    _
  $region3: #{qwen3_moe_forward.2} parent=0 // loop_header
    %s22 = sphi 0, %s26
    %p23 = scmp.ge.s32.totalorder %s22, 11
    %s29 = sphi 0, %s41
    %s30 = sphi 0, %s37
    %s31 = sphi 0, %s29
    %s32 = sphi 0, %s30
    %s33 = sphi 0, %s31
    %s34 = sphi 0, %s32
    %s46 = sphi 0, %s48
    %s49 = sphi 0, %s46
    %s50 = sphi 0, %s49
    %s66 = sphi 0, %s50
    %s76 = sphi 0, %s78
    %s79 = sphi 0, %s76
    %s80 = sphi 0, %s79
    %s96 = sphi 0, %s80
    %s102 = sphi 0, %s104
    %s105 = sphi 0, %s102
    %s106 = sphi 0, %s105
    %s122 = sphi 0, %s106
    %s128 = sphi 0, %s130
    %s131 = sphi 0, %s128
    %s132 = sphi 0, %s131
    %s148 = sphi 0, %s132
  $region4: #{qwen3_moe_forward.2} parent=0 // loop_header_branch
    %25 = sbr.rel (%p23) target = $region8
  $region5: #{qwen3_moe_forward.2} parent=0 // loop_body
    %s27 = ssub.s32 %s22, 1
    %s28 = ssub.s32 %s22, 2
    %s35 = sadd.s32 1, %s30
    %p36 = scmp.ge.s32.totalorder %s35, 1
    %s37 = scalar_select %p36, 0, %s35
    %s38 = sadd.s32 1, %s29
    %s39 = scalar_select %p36, %s38, %s29
    %p40 = scmp.ge.s32.totalorder %s39, 9
    %s41 = scalar_select %p40, 0, %s39
    %s42 = ssub.s32 %s29, %s41
    %s43 = ssub.s32 %s30, %s37
    %s44 = sor.u32 %s42, %s43
    %p45 = scmp.eq.s32.totalorder %s44, 0
    %s47 = sadd.s32 %s46, 1
    %s48 = scalar_select %p45, %s46, %s47
    %p51 = pneg %p45
    %p52 = scmp.eq.s32.totalorder %s22, 8
    %p53 = por %p51, %p52
    %p54 = scmp.ne.s32.totalorder %s46, %s49
    %p55 = scmp.eq.s32.totalorder %s22, 0
    %p56 = por %p54, %p55
    %p57 = scmp.ne.s32.totalorder %s46, %s49
    %p58 = scmp.eq.s32.totalorder %s27, 8
    %p59 = por %p57, %p58
    %p60 = scmp.ne.s32.totalorder %s49, %s50
    %p61 = scmp.eq.s32.totalorder %s27, 0
    %p62 = por %p60, %p61
    %p63 = scmp.ne.s32.totalorder %s49, %s50
    %p64 = scmp.eq.s32.totalorder %s28, 8
    %p65 = por %p63, %p64
    %p67 = scmp.ne.s32.totalorder %s50, %s66
    %p68 = scmp.eq.s32.totalorder %s28, 0
    %p69 = por %p67, %p68
    %s70 = sld [smem:[#allocation4 + %s29]]
    %s71 = sld [smem:[#allocation4 + %s41]]
    %s72 = ssub.s32 %s70, %s71
    %s73 = ssub.s32 %s30, %s37
    %s74 = sor.u32 %s72, %s73
    %p75 = scmp.eq.s32.totalorder %s74, 0
    %s77 = sadd.s32 %s76, 1
    %s78 = scalar_select %p75, %s76, %s77
    %p81 = pneg %p75
    %p82 = scmp.eq.s32.totalorder %s22, 8
    %p83 = por %p81, %p82
    %p84 = scmp.ne.s32.totalorder %s76, %s79
    %p85 = scmp.eq.s32.totalorder %s22, 0
    %p86 = por %p84, %p85
    %p87 = scmp.ne.s32.totalorder %s76, %s79
    %p88 = scmp.eq.s32.totalorder %s27, 8
    %p89 = por %p87, %p88
    %p90 = scmp.ne.s32.totalorder %s79, %s80
    %p91 = scmp.eq.s32.totalorder %s27, 0
    %p92 = por %p90, %p91
    %p93 = scmp.ne.s32.totalorder %s79, %s80
    %p94 = scmp.eq.s32.totalorder %s28, 8
    %p95 = por %p93, %p94
    %p97 = scmp.ne.s32.totalorder %s80, %s96
    %p98 = scmp.eq.s32.totalorder %s28, 0
    %p99 = por %p97, %p98
    %s100 = ssub.s32 %s29, %s41
    %p101 = scmp.eq.s32.totalorder %s100, 0
    %s103 = sadd.s32 %s102, 1
    %s104 = scalar_select %p101, %s102, %s103
    %p107 = pneg %p101
    %p108 = scmp.eq.s32.totalorder %s22, 8
    %p109 = por %p107, %p108
    %p110 = scmp.ne.s32.totalorder %s102, %s105
    %p111 = scmp.eq.s32.totalorder %s22, 0
    %p112 = por %p110, %p111
    %p113 = scmp.ne.s32.totalorder %s102, %s105
    %p114 = scmp.eq.s32.totalorder %s27, 8
    %p115 = por %p113, %p114
    %p116 = scmp.ne.s32.totalorder %s105, %s106
    %p117 = scmp.eq.s32.totalorder %s27, 0
    %p118 = por %p116, %p117
    %p119 = scmp.ne.s32.totalorder %s105, %s106
    %p120 = scmp.eq.s32.totalorder %s28, 8
    %p121 = por %p119, %p120
    %p123 = scmp.ne.s32.totalorder %s106, %s122
    %p124 = scmp.eq.s32.totalorder %s28, 0
    %p125 = por %p123, %p124
    %s126 = ssub.s32 %s29, %s41
    %p127 = scmp.eq.s32.totalorder %s126, 0
    %s129 = sadd.s32 %s128, 1
    %s130 = scalar_select %p127, %s128, %s129
    %p133 = pneg %p127
    %p134 = scmp.eq.s32.totalorder %s22, 8
    %p135 = por %p133, %p134
    %p136 = scmp.ne.s32.totalorder %s128, %s131
    %p137 = scmp.eq.s32.totalorder %s22, 0
    %p138 = por %p136, %p137
    %p139 = scmp.ne.s32.totalorder %s128, %s131
    %p140 = scmp.eq.s32.totalorder %s27, 8
    %p141 = por %p139, %p140
    %p142 = scmp.ne.s32.totalorder %s131, %s132
    %p143 = scmp.eq.s32.totalorder %s27, 0
    %p144 = por %p142, %p143
    %p145 = scmp.ne.s32.totalorder %s131, %s132
    %p146 = scmp.eq.s32.totalorder %s28, 8
    %p147 = por %p145, %p146
    %p149 = scmp.ne.s32.totalorder %s132, %s148
    %p150 = scmp.eq.s32.totalorder %s28, 0
    %p151 = por %p149, %p150
    %p152 = scmp.le.s32.totalorder 1, %s22
    %p153 = scmp.lt.s32.totalorder %s22, 10
    %p154 = pnand %p152, %p153
    %p155 = pneg %p154
    // Predicated region
    $region9: #{qwen3_moe_forward.2} parent=5 // pred_check
      _
    $region10: #{qwen3_moe_forward.2} parent=5 // pred_check_branch
      %157 = sbr.rel (%p154) target = $region12
    $region11: #{qwen3_moe_forward.2} parent=5 // pred_region
      %s158 = ssub.s32 %s22, 1
    $region12: #{qwen3_moe_forward.2} parent=5 // pred_fallthru
      _
    %p159 = scmp.lt.s32.totalorder %s22, 9
    // Predicated region
    $region13: #{qwen3_moe_forward.2} parent=5 // pred_check
      %p160 = pneg %p159
    $region14: #{qwen3_moe_forward.2} parent=5 // pred_check_branch
      %162 = sbr.rel (%p160) target = $region16
    $region15: #{qwen3_moe_forward.2} parent=5 // pred_region
      // Predicated region
      $region17: #{qwen3_moe_forward.2} parent=15 // pred_check
        %p163 = pneg %p56
      $region18: #{qwen3_moe_forward.2} parent=15 // pred_check_branch
        %165 = sbr.rel (%p163) target = $region20
      $region19: #{qwen3_moe_forward.2} parent=15 // pred_region
        %s166 = smul.u32 4, %s29
        %p167 = scmp.lt.s32.totalorder %s166, 35
        %s168 = scalar_select %p167, %s166, 35
        %p169 = scmp.lt.s32.totalorder %s30, 0
        %s170 = scalar_select %p169, %s30, 0
        %s171 = sadd.s32 %s170, %s168
        %s172 = smul.addr %s171, 8
        %s173 = scalar_lea.vmem %s2, %s172
        %s174 = smul.u32 4, %s29
      $region20: #{qwen3_moe_forward.2} parent=15 // pred_fallthru
        _
      // Predicated region
      $region21: #{qwen3_moe_forward.2} parent=15 // pred_check
        %p175 = pneg %p86
      $region22: #{qwen3_moe_forward.2} parent=15 // pred_check_branch
        %177 = sbr.rel (%p175) target = $region24
      $region23: #{qwen3_moe_forward.2} parent=15 // pred_region
        %s178 = sld [smem:[#allocation4 + %s29]]
        %s179 = smul.u32 8, %s30
        %p180 = scmp.lt.s32.totalorder %s178, 7
        %s181 = scalar_select %p180, %s178, 7
        %p182 = scmp.lt.s32.totalorder %s179, 7
        %s183 = scalar_select %p182, %s179, 7
        %s184 = smul.addr %s181, 8
        %s185 = sadd.s32 %s183, %s184
        %s186 = smul.addr %s185, 8
        %s187 = scalar_lea.vmem %s3, %s186
        %s188 = sld [smem:[#allocation4 + %s29]]
        %s189 = smul.u32 8, %s30
      $region24: #{qwen3_moe_forward.2} parent=15 // pred_fallthru
        _
    $region16: #{qwen3_moe_forward.2} parent=5 // pred_fallthru
      _
    %p190 = scmp.le.s32.totalorder 1, %s22
    %p191 = scmp.lt.s32.totalorder %s22, 10
    %p192 = pnand %p190, %p191
    %p193 = pneg %p192
    // Predicated region
    $region25: #{qwen3_moe_forward.2} parent=5 // pred_check
      _
    $region26: #{qwen3_moe_forward.2} parent=5 // pred_check_branch
      %195 = sbr.rel (%p192) target = $region28
    $region27: #{qwen3_moe_forward.2} parent=5 // pred_region
      %s196 = ssub.s32 %s22, 1
      %s197 = smul.u32 4, %s31
      %p198 = scmp.lt.s32.totalorder %s197, 35
      %s199 = scalar_select %p198, %s197, 35
      %p200 = scmp.lt.s32.totalorder %s32, 0
      %s201 = scalar_select %p200, %s32, 0
      %s202 = sadd.s32 %s201, %s199
      %s203 = smul.addr %s202, 8
      %s204 = scalar_lea.vmem %s2, %s203
      %p205 = pneg %p62
      %p206 = pneg %p59
      %s207 = sld [smem:[#allocation4 + %s31]]
      %s208 = smul.u32 8, %s32
      %p209 = scmp.lt.s32.totalorder %s207, 7
      %s210 = scalar_select %p209, %s207, 7
      %p211 = scmp.lt.s32.totalorder %s208, 7
      %s212 = scalar_select %p211, %s208, 7
      %s213 = smul.addr %s210, 8
      %s214 = sadd.s32 %s212, %s213
      %s215 = smul.addr %s214, 8
      %s216 = scalar_lea.vmem %s3, %s215
      %p217 = pneg %p92
      %p218 = pneg %p89
      %p219 = pneg %p118
      %p220 = pneg %p115
      %s221 = smul.u32 4, %s31
      %p222 = scmp.lt.s32.totalorder %s221, 35
      %s223 = scalar_select %p222, %s221, 35
      %s224 = smul.addr %s223, 8
      %s225 = scalar_lea.vmem %s4, %s224
      %p226 = pneg %p144
      %p227 = pneg %p141
      %s228 = smul.u32 4, %s31
      %p229 = scmp.lt.s32.totalorder %s228, 35
      %s230 = scalar_select %p229, %s228, 35
      %s231 = smul.addr %s230, 8
      %s232 = scalar_lea.vmem %s5, %s231
      %s233 = smul.u32 4, %s31
      %p234 = scmp.lt.s32.totalorder %s233, 35
      %s235 = scalar_select %p234, %s233, 35
      %p236 = scmp.lt.s32.totalorder %s32, 0
      %s237 = scalar_select %p236, %s32, 0
      %s238 = sadd.s32 %s237, %s235
      %s239 = smul.addr %s238, 8
      %s240 = scalar_lea.vmem %s2, %s239
      %s241 = smul.u32 4, %s31
      %s242 = sld [smem:[#allocation4 + %s31]]
      %s243 = smul.u32 8, %s32
      %p244 = scmp.lt.s32.totalorder %s242, 7
      %s245 = scalar_select %p244, %s242, 7
      %p246 = scmp.lt.s32.totalorder %s243, 7
      %s247 = scalar_select %p246, %s243, 7
      %s248 = smul.addr %s245, 8
      %s249 = sadd.s32 %s247, %s248
      %s250 = smul.addr %s249, 8
      %s251 = scalar_lea.vmem %s3, %s250
      %s252 = sld [smem:[#allocation4 + %s31]]
      %s253 = smul.u32 8, %s32
      %s254 = smul.u32 4, %s31
      %p255 = scmp.lt.s32.totalorder %s254, 35
      %s256 = scalar_select %p255, %s254, 35
      %s257 = smul.addr %s256, 8
      %s258 = scalar_lea.vmem %s4, %s257
      %s259 = smul.u32 4, %s31
      %s260 = smul.u32 4, %s31
      %p261 = scmp.lt.s32.totalorder %s260, 35
      %s262 = scalar_select %p261, %s260, 35
      %s263 = smul.addr %s262, 8
      %s264 = scalar_lea.vmem %s5, %s263
      %s265 = smul.u32 4, %s31
      %p266 = scmp.eq.s32.totalorder %s32, 0
      // Predicated region
      $region29: #{qwen3_moe_forward.2} parent=27 // pred_check
        %p267 = pneg %p266
      $region30: #{qwen3_moe_forward.2} parent=27 // pred_check_branch
        %269 = sbr.rel (%p267) target = $region32
      $region31: #{qwen3_moe_forward.2} parent=27 // pred_region
        %270 = vst [vmem:[#allocation2] sm:$0xff] 0.0
        %271 = vst [vmem:[#allocation2 + $0x8] sm:$0xff] 0.0
        %272 = vst [vmem:[#allocation2 + $0x10] sm:$0xff] 0.0
        %273 = vst [vmem:[#allocation2 + $0x18] sm:$0xff] 0.0
      $region32: #{qwen3_moe_forward.2} parent=27 // pred_fallthru
        _
      %s274 = sld [smem:[#allocation5 + %s31]]
      %p275 = scmp.gt.s32.totalorder %s274, 0
      // Predicated region
      $region33: #{qwen3_moe_forward.2} parent=27 // pred_check
        %p276 = pneg %p275
      $region34: #{qwen3_moe_forward.2} parent=27 // pred_check_branch
        %278 = sbr.rel (%p276) target = $region36
      $region35: #{qwen3_moe_forward.2} parent=27 // pred_region
        %v279 = vld [vmem:[#allocation2] sm:$0xff]
        %v280 = vld [vmem:[#allocation2 + $0x8] sm:$0xff]
        %v281 = vld [vmem:[#allocation2 + $0x10] sm:$0xff]
        %v282 = vld [vmem:[#allocation2 + $0x18] sm:$0xff]
        %v283 = vld [vmem:[%s240] sm:$0xff]
        %v284 = vld [vmem:[%s240 + $0x8] sm:$0xff]
        %v285 = vld [vmem:[%s240 + $0x10] sm:$0xff]
        %v286 = vld [vmem:[%s240 + $0x18] sm:$0xff]
        %v287 = vld [vmem:[%s251] sm:$0xff]
        %v288 = vld [vmem:[%s251 + $0x8] sm:$0xff]
        %v289 = vld [vmem:[%s251 + $0x10] sm:$0xff]
        %v290 = vld [vmem:[%s251 + $0x18] sm:$0xff]
        %v291 = vld [vmem:[%s251 + $0x20] sm:$0xff]
        %v292 = vld [vmem:[%s251 + $0x28] sm:$0xff]
        %v293 = vld [vmem:[%s251 + $0x30] sm:$0xff]
        %v294 = vld [vmem:[%s251 + $0x38] sm:$0xff]
        %vm295 = vcmask 523264
        %v297 = vsel %vm295, %v283, 0
        %v300 = vsel %vm295, %v284, 0
        %v303 = vsel %vm295, %v285, 0
        %v306 = vsel %vm295, %v286, 0
        %308 = vmatprep.subr.mxu0 0.0
        %309 = vmatpush1.msra.mxu0 0.0
        %310 = vmatprep.subr.mxu0 0.0
        %311 = vmatpush1.msra.mxu0 0.0
        %312 = vmatprep.subr.mxu0 0.0
        %313 = vmatpush1.msra.mxu0 0.0
        %314 = vmatprep.subr.mxu0 0.0
        %315 = vmatpush1.msra.mxu0 0.0
        %316 = vmatprep.subr.mxu0 0.0
        %317 = vmatpush1.msra.mxu0 0.0
        %318 = vmatprep.subr.mxu0 0.0
        %319 = vmatpush1.msra.mxu0 0.0
        %320 = vmatprep.subr.mxu0 0.0
        %321 = vmatpush1.msra.mxu0 0.0
        %322 = vmatprep.subr.mxu0 0.0
        %323 = vmatpush1.msra.mxu0 0.0
        %324 = vmatprep.subr.mxu0 0.0
        %325 = vmatpush1.msra.mxu0 %v294
        %326 = vmatprep.subr.mxu0 0.0
        %327 = vmatpush1.msra.mxu0 %v293
        %328 = vmatprep.subr.mxu0 0.0
        %329 = vmatpush1.msra.mxu0 %v292
        %330 = vmatprep.subr.mxu0 0.0
        %331 = vmatpush1.msra.mxu0 %v291
        %332 = vmatprep.subr.mxu0 0.0
        %333 = vmatpush1.msra.mxu0 %v290
        %334 = vmatprep.subr.mxu0 0.0
        %335 = vmatpush1.msra.mxu0 %v289
        %336 = vmatprep.subr.mxu0 0.0
        %337 = vmatpush1.msra.mxu0 %v288
        %338 = vmatprep.subr.mxu0 0.0
        %339 = vmatpush1.msra.mxu0 %v287
        %340 = vmatprep.subr.mxu0 0.0
        %341 = vmatpush2.msra.mxu0 0.0
        %342 = vmatprep.subr.mxu0 0.0
        %343 = vmatpush2.msra.mxu0 0.0
        %344 = vmatprep.subr.mxu0 0.0
        %345 = vmatpush2.msra.mxu0 0.0
        %346 = vmatprep.subr.mxu0 0.0
        %347 = vmatpush2.msra.mxu0 0.0
        %348 = vmatprep.subr.mxu0 0.0
        %349 = vmatpush2.msra.mxu0 0.0
        %350 = vmatprep.subr.mxu0 0.0
        %351 = vmatpush2.msra.mxu0 0.0
        %352 = vmatprep.subr.mxu0 0.0
        %353 = vmatpush2.msra.mxu0 0.0
        %354 = vmatprep.subr.mxu0 0.0
        %355 = vmatpush2.msra.mxu0 0.0
        %356 = vmatprep.subr.mxu0 0.0
        %357 = vmatpush2.msra.mxu0 0.0
        %358 = vmatprep.subr.mxu0 0.0
        %359 = vmatpush2.msra.mxu0 0.0
        %360 = vmatprep.subr.mxu0 0.0
        %361 = vmatpush2.msra.mxu0 0.0
        %362 = vmatprep.subr.mxu0 0.0
        %363 = vmatpush2.msra.mxu0 0.0
        %364 = vmatprep.subr.mxu0 0.0
        %365 = vmatpush2.msra.mxu0 0.0
        %366 = vmatprep.subr.mxu0 0.0
        %367 = vmatpush2.msra.mxu0 0.0
        %368 = vmatprep.subr.mxu0 0.0
        %369 = vmatpush2.msra.mxu0 0.0
        %370 = vmatprep.subr.mxu0 0.0
        %371 = vmatpush2.msra.mxu0 0.0
        %372 = vmatprep.mubr.f32.mxu0 0.0
        %373 = vmatmul.mubr.f32.gmra.mxu0 %v297
        %v374 = vpop.f32.mrf.mxu0
        %v375 = vadd.f32 0.0, %v374
        %v376 = vpop.f32.mrf.mxu0
        %377 = vmatprep.mubr.f32.mxu0 0.0
        %378 = vmatmul.mubr.f32.gmra.mxu0 %v300
        %v379 = vpop.f32.mrf.mxu0
        %v380 = vadd.f32 0.0, %v379
        %v381 = vpop.f32.mrf.mxu0
        %382 = vmatprep.mubr.f32.mxu0 0.0
        %383 = vmatmul.mubr.f32.gmra.mxu0 %v303
        %v384 = vpop.f32.mrf.mxu0
        %v385 = vadd.f32 0.0, %v384
        %v386 = vpop.f32.mrf.mxu0
        %387 = vmatprep.mubr.f32.mxu0 0.0
        %388 = vmatmul.mubr.f32.gmra.mxu0 %v306
        %v389 = vpop.f32.mrf.mxu0
        %v390 = vadd.f32 0.0, %v389
        %v391 = vpop.f32.mrf.mxu0
        %392 = vdwg.mxu0
        %v393 = vadd.f32 %v279, %v375
        %v394 = vadd.f32 %v280, %v380
        %v395 = vadd.f32 %v281, %v385
        %v396 = vadd.f32 %v282, %v390
        %397 = vst [vmem:[#allocation2] sm:$0xff] %v393
        %398 = vst [vmem:[#allocation2 + $0x8] sm:$0xff] %v394
        %399 = vst [vmem:[#allocation2 + $0x10] sm:$0xff] %v395
        %400 = vst [vmem:[#allocation2 + $0x18] sm:$0xff] %v396
      $region36: #{qwen3_moe_forward.2} parent=27 // pred_fallthru
        _
      // Predicated region
      $region37: #{qwen3_moe_forward.2} parent=27 // pred_check
        %p401 = pneg %p266
      $region38: #{qwen3_moe_forward.2} parent=27 // pred_check_branch
        %403 = sbr.rel (%p401) target = $region40
      $region39: #{qwen3_moe_forward.2} parent=27 // pred_region
        %v404 = vld [vmem:[#allocation2] sm:$0xff]
        %v405 = vld [vmem:[#allocation2 + $0x8] sm:$0xff]
        %v406 = vld [vmem:[#allocation2 + $0x10] sm:$0xff]
        %v407 = vld [vmem:[#allocation2 + $0x18] sm:$0xff]
        %408 = vst [vmem:[%s258] sm:$0xff] %v404
        %409 = vst [vmem:[%s258 + $0x8] sm:$0xff] %v405
        %410 = vst [vmem:[%s258 + $0x10] sm:$0xff] %v406
        %411 = vst [vmem:[%s258 + $0x18] sm:$0xff] %v407
        %v412 = vsub.f32 0.0, %v404
        %v413 = vsub.f32 0.0, %v405
        %v414 = vsub.f32 0.0, %v406
        %v415 = vsub.f32 0.0, %v407
        %v416 = vmul.f32 %v412, 1.442695
        %v417 = vpow.pop %v416
        %v418 = vmul.f32 %v413, 1.442695
        %v419 = vpow.pop %v418
        %v420 = vmul.f32 %v414, 1.442695
        %v421 = vpow.pop %v420
        %v422 = vmul.f32 %v415, 1.442695
        %v423 = vpow.pop %v422
        %v424 = vadd.f32 %v417, 1.0
        %v425 = vadd.f32 %v419, 1.0
        %v426 = vadd.f32 %v421, 1.0
        %v427 = vadd.f32 %v423, 1.0
        %v428 = vrcp.pop %v424
        %v429 = vmul.f32 1.0, %v428
        %v430 = vrcp.pop %v425
        %v431 = vmul.f32 1.0, %v430
        %v432 = vrcp.pop %v426
        %v433 = vmul.f32 1.0, %v432
        %v434 = vrcp.pop %v427
        %v435 = vmul.f32 1.0, %v434
        %v436 = vmul.f32 %v404, %v429
        %v437 = vmul.f32 %v405, %v431
        %v438 = vmul.f32 %v406, %v433
        %v439 = vmul.f32 %v407, %v435
        %444 = vrot.lane.b32.xlu0 %v404, 64
        %v445 = vpop.permute.xlu0 %444
        %446 = vrot.lane.b32.xlu0 %v405, 64
        %v447 = vpop.permute.xlu0 %446
        %448 = vrot.lane.b32.xlu0 %v406, 64
        %v449 = vpop.permute.xlu0 %448
        %450 = vrot.lane.b32.xlu0 %v407, 64
        %v451 = vpop.permute.xlu0 %450
        %v456 = vmul.f32 %v436, %v445
        %v457 = vmul.f32 %v437, %v447
        %v458 = vmul.f32 %v438, %v449
        %v459 = vmul.f32 %v439, %v451
        %vm460 = vcmask 523264
        %461 = vst.msk [vmem:[%s264] sm:$0xff] %vm460, %v456
        %462 = vst.msk [vmem:[%s264 + $0x8] sm:$0xff] %vm460, %v457
        %463 = vst.msk [vmem:[%s264 + $0x10] sm:$0xff] %vm460, %v458
        %464 = vst.msk [vmem:[%s264 + $0x18] sm:$0xff] %vm460, %v459
      $region40: #{qwen3_moe_forward.2} parent=27 // pred_fallthru
        _
      %s465 = smul.u32 4, %s31
      %p466 = scmp.lt.s32.totalorder %s465, 35
      %s467 = scalar_select %p466, %s465, 35
      %s468 = smul.addr %s467, 8
      %s469 = scalar_lea.vmem %s4, %s468
      %s470 = smul.u32 4, %s31
      %p471 = scmp.lt.s32.totalorder %s470, 35
      %s472 = scalar_select %p471, %s470, 35
      %s473 = smul.addr %s472, 8
      %s474 = scalar_lea.vmem %s5, %s473
      // Predicated region
      $region41: #{qwen3_moe_forward.2} parent=27 // pred_check
        %p475 = pneg %p115
      $region42: #{qwen3_moe_forward.2} parent=27 // pred_check_branch
        %477 = sbr.rel (%p475) target = $region44
      $region43: #{qwen3_moe_forward.2} parent=27 // pred_region
        %s478 = smul.u32 4, %s31
      $region44: #{qwen3_moe_forward.2} parent=27 // pred_fallthru
        _
      // Predicated region
      $region45: #{qwen3_moe_forward.2} parent=27 // pred_check
        %p479 = pneg %p141
      $region46: #{qwen3_moe_forward.2} parent=27 // pred_check_branch
        %481 = sbr.rel (%p479) target = $region48
      $region47: #{qwen3_moe_forward.2} parent=27 // pred_region
        %s482 = smul.u32 4, %s31
      $region48: #{qwen3_moe_forward.2} parent=27 // pred_fallthru
        _
    $region28: #{qwen3_moe_forward.2} parent=5 // pred_fallthru
      _
    %p483 = scmp.le.s32.totalorder 2, %s22
    // Predicated region
    $region49: #{qwen3_moe_forward.2} parent=5 // pred_check
      %p484 = pneg %p483
    $region50: #{qwen3_moe_forward.2} parent=5 // pred_check_branch
      %486 = sbr.rel (%p484) target = $region52
    $region51: #{qwen3_moe_forward.2} parent=5 // pred_region
      %s487 = ssub.s32 %s22, 2
      // Predicated region
      $region53: #{qwen3_moe_forward.2} parent=51 // pred_check
        %p488 = pneg %p121
      $region54: #{qwen3_moe_forward.2} parent=51 // pred_check_branch
        %490 = sbr.rel (%p488) target = $region56
      $region55: #{qwen3_moe_forward.2} parent=51 // pred_region
        %s491 = smul.u32 4, %s33
        %p492 = scmp.lt.s32.totalorder %s491, 35
        %s493 = scalar_select %p492, %s491, 35
        %s494 = smul.addr %s493, 8
        %s495 = scalar_lea.vmem %s4, %s494
      $region56: #{qwen3_moe_forward.2} parent=51 // pred_fallthru
        _
      // Predicated region
      $region57: #{qwen3_moe_forward.2} parent=51 // pred_check
        %p496 = pneg %p147
      $region58: #{qwen3_moe_forward.2} parent=51 // pred_check_branch
        %498 = sbr.rel (%p496) target = $region60
      $region59: #{qwen3_moe_forward.2} parent=51 // pred_region
        %s499 = smul.u32 4, %s33
        %p500 = scmp.lt.s32.totalorder %s499, 35
        %s501 = scalar_select %p500, %s499, 35
        %s502 = smul.addr %s501, 8
        %s503 = scalar_lea.vmem %s5, %s502
      $region60: #{qwen3_moe_forward.2} parent=51 // pred_fallthru
        _
    $region52: #{qwen3_moe_forward.2} parent=5 // pred_fallthru
      _
  $region6: #{qwen3_moe_forward.2} parent=0 // loop_footer
    %s26 = sadd.s32 1, %s22
  $region7: #{qwen3_moe_forward.2} parent=0 // loop_footer_branch
    %21 = sbr.rel target = $region3
  $region8: #{qwen3_moe_forward.2} parent=0 // loop_exit
    _

</llo_original>
